<compile_context>
chip_gen: v7x
topology: tpu7x:2x2x1
jax: 0.10.0
libtpu: 0.0.40
codegen_flags: <defaults>
</compile_context>

<pallas_src>
import math
import jax
import jax.numpy as jnp
from jax.experimental import pallas as pl
from jax.experimental.pallas import tpu as pltpu


_VMEM_LIMIT = 32 * 1024 * 1024  # safe scoped-VMEM request on v5e/v6e/v7x


def _round_up(x, m):
    return ((x + m - 1) // m) * m


def _pad_feature(d):
    # Lane-align; for wide dims pad to a multiple of 256 so tiles stay >= 256
    # (e.g. 640 -> 768) instead of falling back to 128-wide tiles.
    p = _round_up(d, 128)
    if p > 512:
        p = _round_up(d, 256)
    return p


def _pick_tile(dim_p, candidates):
    for c in candidates:
        if dim_p % c == 0:
            return c
    return 128


def _gll_direct_kernel(x_ref, w_ref, o_ref):
    # Single-shot (no K reduction): write the MXU result straight to the
    # output tile -- no f32 scratch, no epilogue VMEM->VMEM copy.
    o_ref[...] = jnp.dot(x_ref[...], w_ref[...],
                         preferred_element_type=jnp.float32).astype(o_ref.dtype)


def _gll_acc_kernel(x_ref, w_ref, o_ref, acc_ref):
    # Tiled K reduction with an f32 VMEM accumulator; K is the innermost
    # grid axis, init/finalize gated with pl.when.
    k = pl.program_id(3)

    @pl.when(k == 0)
    def _():
        acc_ref[...] = jnp.zeros_like(acc_ref)

    acc_ref[...] += jnp.dot(x_ref[...], w_ref[...],
                            preferred_element_type=jnp.float32)

    @pl.when(k == pl.num_programs(3) - 1)
    def _():
        o_ref[...] = acc_ref[...].astype(o_ref.dtype)


def group_linear_pallas(x, w, *, stream_dtype=None,
                        vmem_block_budget=20 * 1024 * 1024):
    """GroupLinearLayer forward.

    x: (B, num_blocks, din), w: (num_blocks, din, dout) -> (B, num_blocks, dout)

    stream_dtype: optional dtype (e.g. jnp.bfloat16) to stream both operands
      in; accumulation stays f32 and the output keeps x's original dtype.
    vmem_block_budget: byte budget deciding whether a whole per-block
      (din_p, dout_p) weight slab can stay VMEM-resident (fast path).
    """
    B, nb, din = x.shape
    nb_w, din_w, dout = w.shape
    assert nb_w == nb and din_w == din

    out_dtype = x.dtype
    if w.dtype != x.dtype:
        w = w.astype(x.dtype)          # pin operands to one dtype
    if stream_dtype is not None:
        x = x.astype(stream_dtype)
        w = w.astype(stream_dtype)
    sb = jnp.dtype(x.dtype).itemsize   # streamed bytes / element
    ob = jnp.dtype(out_dtype).itemsize

    din_p = _pad_feature(din)
    dout_p = _pad_feature(dout)
    if B <= 512:
        tm = _round_up(max(B, 1), 8)
        B_p = tm
    else:
        tm = 512
        B_p = _round_up(B, tm)
    mt = B_p // tm

    # Zero-padding the contraction dim keeps the math exact; only pay for it
    # when the shapes are actually unaligned.
    if (B_p, din_p) != (B, din):
        x = jnp.pad(x, ((0, B_p - B), (0, 0), (0, din_p - din)))
    if (din_p, dout_p) != (din, dout):
        w = jnp.pad(w, ((0, 0), (0, din_p - din), (0, dout_p - dout)))

    # Free, contiguous reshapes -- no HBM relayout.
    x_flat = x.reshape(B_p, nb * din_p)        # (B_p, nb*din_p)
    w_flat = w.reshape(nb * din_p, dout_p)     # (nb*din_p, dout_p)
    out_shape = jax.ShapeDtypeStruct((B_p, nb * dout_p), out_dtype)

    def cparams(sem):
        return pltpu.CompilerParams(dimension_semantics=sem,
                                    vmem_limit_bytes=_VMEM_LIMIT)

    # ---- Fast path: whole per-block weight slab resident across the M sweep.
    resident_bytes = (2 * din_p * dout_p * sb   # w slab, double-buffered
                      + 2 * tm * din_p * sb     # x tiles
                      + 2 * tm * dout_p * ob)   # out tiles
    if resident_bytes <= vmem_block_budget:
        out_flat = pl.pallas_call(
            _gll_direct_kernel,
            out_shape=out_shape,
            grid_spec=pltpu.PrefetchScalarGridSpec(
                num_scalar_prefetch=0,
                grid=(nb, mt),
                in_specs=[
                    pl.BlockSpec((tm, din_p), lambda g, i: (i, g)),
                    # index_map independent of i -> slab stays VMEM-resident
                    # across the M loop; each block's weights leave HBM once.
                    pl.BlockSpec((din_p, dout_p), lambda g, i: (g, 0)),
                ],
                out_specs=pl.BlockSpec((tm, dout_p), lambda g, i: (i, g)),
            ),
            compiler_params=cparams(("parallel", "parallel")),
        )(x_flat, w_flat)
    else:
        # ---- General tiled path.
        tk = _pick_tile(din_p, (1024, 512, 256, 128))
        tn = _pick_tile(dout_p, (512, 256, 128))
        kt = din_p // tk
        nt = dout_p // tn

        if kt == 1:
            # No K reduction: direct-store kernel, no scratch accumulator.
            out_flat = pl.pallas_call(
                _gll_direct_kernel,
                out_shape=out_shape,
                grid_spec=pltpu.PrefetchScalarGridSpec(
                    num_scalar_prefetch=0,
                    grid=(nb, mt, nt),
                    in_specs=[
                        pl.BlockSpec((tm, din_p), lambda g, i, j: (i, g)),
                        pl.BlockSpec((din_p, tn), lambda g, i, j: (g, j)),
                    ],
                    out_specs=pl.BlockSpec(
                        (tm, tn), lambda g, i, j: (i, g * nt + j)),
                ),
                compiler_params=cparams(("parallel", "parallel", "parallel")),
            )(x_flat, w_flat)
        else:
            out_flat = pl.pallas_call(
                _gll_acc_kernel,
                out_shape=out_shape,
                grid_spec=pltpu.PrefetchScalarGridSpec(
                    num_scalar_prefetch=0,
                    grid=(nb, mt, nt, kt),          # reduction (din) axis last
                    in_specs=[
                        pl.BlockSpec((tm, tk),
                                     lambda g, i, j, k: (i, g * kt + k)),
                        pl.BlockSpec((tk, tn),
                                     lambda g, i, j, k: (g * kt + k, j)),
                    ],
                    out_specs=pl.BlockSpec(
                        (tm, tn), lambda g, i, j, k: (i, g * nt + j)),
                    scratch_shapes=[pltpu.VMEM((tm, tn), jnp.float32)],
                ),
                compiler_params=cparams(
                    ("parallel", "parallel", "parallel", "arbitrary")),
            )(x_flat, w_flat)

    out = out_flat.reshape(B_p, nb, dout_p)
    if (B_p, dout_p) != (B, dout):
        out = out[:B, :, :dout]
    return out


def init_group_linear_weight(key, din, dout, num_blocks, topk=None,
                             dtype=jnp.float32):
    if topk is None:
        scale = math.sqrt(2.0 / din)
    else:
        scale = math.sqrt(2.0 / (din * topk))
    return scale * jax.random.normal(key, (num_blocks, din, dout), dtype=dtype)


def group_linear_reference(x, w):
    # Pure-JAX reference of the PyTorch forward.
    x_bm = jnp.transpose(x, (1, 0, 2))                               # (nb, B, din)
    y_bm = jnp.einsum("kbd,kde->kbe", x_bm, w,
                      preferred_element_type=jnp.float32).astype(x.dtype)
    return jnp.transpose(y_bm, (1, 0, 2))                            # (B, nb, dout)


if __name__ == "__main__":
    k1, k2, k3, k4 = jax.random.split(jax.random.PRNGKey(0), 4)

    # 1) AIM-sized problem (B=8, nb=4, din=dout=32): exercises the collapsed
    #    fast path (grid=(nb, 1), VMEM-resident weight slab, no scratch).
    B, nb, din, dout = 8, 4, 32, 32
    x = jax.random.normal(k1, (B, nb, din), dtype=jnp.float32)
    w = init_group_linear_weight(k2, din, dout, nb)

    gll = jax.jit(group_linear_pallas)
    out = jax.block_until_ready(gll(x, w))
    ref = group_linear_reference(x, w)
    assert out.shape == (B, nb, dout)
    assert jnp.allclose(out, ref, atol=1e-4, rtol=1e-4), float(
        jnp.max(jnp.abs(out - ref)))

    # 2) bf16 streaming on the same problem (f32 accumulation on the MXU).
    gll_bf16 = jax.jit(
        lambda a, b: group_linear_pallas(a, b, stream_dtype=jnp.bfloat16))
    out_bf16 = jax.block_until_ready(gll_bf16(x, w))
    assert jnp.allclose(out_bf16, ref, atol=1e-1, rtol=5e-2), float(
        jnp.max(jnp.abs(out_bf16 - ref)))

    # 3) Ragged shapes, forced onto the tiled K-reduction path
    #    (vmem_block_budget=1 disables the resident-slab fast path).
    B2, nb2, din2, dout2 = 16, 2, 300, 200
    x2 = jax.random.normal(k3, (B2, nb2, din2), dtype=jnp.float32)
    w2 = init_group_linear_weight(k4, din2, dout2, nb2)
    gll_tiled = jax.jit(
        lambda a, b: group_linear_pallas(a, b, vmem_block_budget=1))
    out2 = jax.block_until_ready(gll_tiled(x2, w2))
    ref2 = group_linear_reference(x2, w2)
    assert out2.shape == (B2, nb2, dout2)
    assert jnp.allclose(out2, ref2, atol=1e-3, rtol=1e-3), float(
        jnp.max(jnp.abs(out2 - ref2)))

    print("KERNEL_OK")
</pallas_src>

<mosaic_0001>
module attributes {stable_mosaic.version = 11 : i64} {
  func.func @_gll_direct_kernel(%arg0: i32, %arg1: i32, %arg2: memref<8x128xf32, #tpu.memory_space<vmem>>, %arg3: memref<128x128xf32, #tpu.memory_space<vmem>>, %arg4: memref<8x128xf32, #tpu.memory_space<vmem>>) attributes {dimension_semantics = [#tpu.dimension_semantics<parallel>, #tpu.dimension_semantics<parallel>], iteration_bounds = array<i64: 4, 1>, scalar_prefetch = 0 : i64, scratch_operands = 0 : i64, tpu.core_type = #tpu.core_type<tc>, window_params = [{transform_indices = @transform_0, window_bounds = array<i64: 8, 128>}, {transform_indices = @transform_1, window_bounds = array<i64: 128, 128>}, {transform_indices = @transform_2, window_bounds = array<i64: 8, 128>}]} {
    %c0 = arith.constant 0 : index
    %c0_0 = arith.constant 0 : index
    %0 = vector.load %arg2[%c0, %c0_0] : memref<8x128xf32, #tpu.memory_space<vmem>>, vector<8x128xf32>
    %c0_1 = arith.constant 0 : index
    %c0_2 = arith.constant 0 : index
    %1 = vector.load %arg3[%c0_1, %c0_2] : memref<128x128xf32, #tpu.memory_space<vmem>>, vector<128x128xf32>
    %cst = arith.constant dense<0.000000e+00> : vector<8x128xf32>
    %2 = tpu.matmul %0, %1, %cst {dimension_numbers = #tpu.dot_dimension_numbers<[1], [0], [0], [1], [0, 0, 1, 1], [], []>} : vector<8x128xf32>, vector<128x128xf32>, vector<8x128xf32> -> vector<8x128xf32>
    %c0_3 = arith.constant 0 : index
    %c0_4 = arith.constant 0 : index
    %3 = vector.load %arg4[%c0_3, %c0_4] : memref<8x128xf32, #tpu.memory_space<vmem>>, vector<8x128xf32>
    tpu.vector_store %arg4[%c0_3, %c0_4], %2 {strides = array<i32>} : memref<8x128xf32, #tpu.memory_space<vmem>>, vector<8x128xf32>,
    return
  }
  func.func @transform_0(%arg0: i32, %arg1: i32) -> (i32, i32) {
    %c0_i32 = arith.constant 0 : i32
    return %arg1, %arg0 : i32, i32
  }
  func.func @transform_1(%arg0: i32, %arg1: i32) -> (i32, i32) {
    %c0_i32 = arith.constant 0 : i32
    %c0_i32_0 = arith.constant 0 : i32
    return %arg0, %c0_i32 : i32, i32
  }
  func.func @transform_2(%arg0: i32, %arg1: i32) -> (i32, i32) {
    %c0_i32 = arith.constant 0 : i32
    return %arg1, %arg0 : i32, i32
  }
}

</mosaic_0001>

<llo_original>
// kernel: group_linear_pallas.1
$region0: #{group_linear_pallas.1}
  #allocation0 [shape = 'u32[]', space=smem, size = 0x4, offset = 0x4, fixed_abs, tag = 'smem constant byte address 0x4 - core index']
  #allocation1 [shape = 'u32[144,128]{1,0:T(1,128)}', space=vmem, size = 0x12000, scoped, tag = 'internal scratch']
  %s0 = inlined_call_operand.vmem [shape: f32[8,512], index: 0, kind: input, shape index: {}]
  %s1 = inlined_call_operand.vmem [shape: f32[512,128], index: 1, kind: input, shape index: {}]
  %s2 = inlined_call_operand.vmem [shape: f32[8,512], index: 2, kind: output, shape index: {}]
  %s3 = sld [smem:[#allocation0]]
  $region41: #{group_linear_pallas.1} parent=0
    _
  %s5 = ssub.s32 1, %s3
  %s6 = scalar_select 0, %s5, %s3
  loop: start=0, step=1, limit=6
  $region2: #{group_linear_pallas.1} parent=0 // loop_pre_header
    _
  $region3: #{group_linear_pallas.1} parent=0 // loop_header
    %s8 = sphi 0, %s12
    %p9 = scmp.ge.s32.totalorder %s8, 6
    %s15 = sphi 0, %s27
    %s16 = sphi 0, %s23
    %s17 = sphi 0, %s15
    %s18 = sphi 0, %s16
    %s19 = sphi 0, %s17
    %s20 = sphi 0, %s18
    %s32 = sphi 0, %s34
    %s35 = sphi 0, %s32
    %s36 = sphi 0, %s35
    %s52 = sphi 0, %s36
    %s58 = sphi 0, %s60
    %s61 = sphi 0, %s58
    %s62 = sphi 0, %s61
    %s78 = sphi 0, %s62
    %s86 = sphi 0, %s88
    %s89 = sphi 0, %s86
    %s90 = sphi 0, %s89
    %s106 = sphi 0, %s90
  $region4: #{group_linear_pallas.1} parent=0 // loop_header_branch
    %11 = sbr.rel (%p9) target = $region8
  $region5: #{group_linear_pallas.1} parent=0 // loop_body
    %s13 = ssub.s32 %s8, 1
    %s14 = ssub.s32 %s8, 2
    %s21 = sadd.s32 1, %s16
    %p22 = scmp.ge.s32.totalorder %s21, 1
    %s23 = scalar_select %p22, 0, %s21
    %s24 = sadd.s32 1, %s15
    %s25 = scalar_select %p22, %s24, %s15
    %p26 = scmp.ge.s32.totalorder %s25, 4
    %s27 = scalar_select %p26, 0, %s25
    %s28 = ssub.s32 %s16, %s23
    %s29 = ssub.s32 %s15, %s27
    %s30 = sor.u32 %s28, %s29
    %p31 = scmp.eq.s32.totalorder %s30, 0
    %s33 = sadd.s32 %s32, 1
    %s34 = scalar_select %p31, %s32, %s33
    %p37 = pneg %p31
    %p38 = scmp.eq.s32.totalorder %s8, 3
    %p39 = por %p37, %p38
    %p40 = scmp.ne.s32.totalorder %s32, %s35
    %p41 = scmp.eq.s32.totalorder %s8, 0
    %p42 = por %p40, %p41
    %p43 = scmp.ne.s32.totalorder %s32, %s35
    %p44 = scmp.eq.s32.totalorder %s13, 3
    %p45 = por %p43, %p44
    %p46 = scmp.ne.s32.totalorder %s35, %s36
    %p47 = scmp.eq.s32.totalorder %s13, 0
    %p48 = por %p46, %p47
    %p49 = scmp.ne.s32.totalorder %s35, %s36
    %p50 = scmp.eq.s32.totalorder %s14, 3
    %p51 = por %p49, %p50
    %p53 = scmp.ne.s32.totalorder %s36, %s52
    %p54 = scmp.eq.s32.totalorder %s14, 0
    %p55 = por %p53, %p54
    %s56 = ssub.s32 %s15, %s27
    %p57 = scmp.eq.s32.totalorder %s56, 0
    %s59 = sadd.s32 %s58, 1
    %s60 = scalar_select %p57, %s58, %s59
    %p63 = pneg %p57
    %p64 = scmp.eq.s32.totalorder %s8, 3
    %p65 = por %p63, %p64
    %p66 = scmp.ne.s32.totalorder %s58, %s61
    %p67 = scmp.eq.s32.totalorder %s8, 0
    %p68 = por %p66, %p67
    %p69 = scmp.ne.s32.totalorder %s58, %s61
    %p70 = scmp.eq.s32.totalorder %s13, 3
    %p71 = por %p69, %p70
    %p72 = scmp.ne.s32.totalorder %s61, %s62
    %p73 = scmp.eq.s32.totalorder %s13, 0
    %p74 = por %p72, %p73
    %p75 = scmp.ne.s32.totalorder %s61, %s62
    %p76 = scmp.eq.s32.totalorder %s14, 3
    %p77 = por %p75, %p76
    %p79 = scmp.ne.s32.totalorder %s62, %s78
    %p80 = scmp.eq.s32.totalorder %s14, 0
    %p81 = por %p79, %p80
    %s82 = ssub.s32 %s16, %s23
    %s83 = ssub.s32 %s15, %s27
    %s84 = sor.u32 %s82, %s83
    %p85 = scmp.eq.s32.totalorder %s84, 0
    %s87 = sadd.s32 %s86, 1
    %s88 = scalar_select %p85, %s86, %s87
    %p91 = pneg %p85
    %p92 = scmp.eq.s32.totalorder %s8, 3
    %p93 = por %p91, %p92
    %p94 = scmp.ne.s32.totalorder %s86, %s89
    %p95 = scmp.eq.s32.totalorder %s8, 0
    %p96 = por %p94, %p95
    %p97 = scmp.ne.s32.totalorder %s86, %s89
    %p98 = scmp.eq.s32.totalorder %s13, 3
    %p99 = por %p97, %p98
    %p100 = scmp.ne.s32.totalorder %s89, %s90
    %p101 = scmp.eq.s32.totalorder %s13, 0
    %p102 = por %p100, %p101
    %p103 = scmp.ne.s32.totalorder %s89, %s90
    %p104 = scmp.eq.s32.totalorder %s14, 3
    %p105 = por %p103, %p104
    %p107 = scmp.ne.s32.totalorder %s90, %s106
    %p108 = scmp.eq.s32.totalorder %s14, 0
    %p109 = por %p107, %p108
    %p110 = scmp.le.s32.totalorder 1, %s8
    %p111 = scmp.lt.s32.totalorder %s8, 5
    %p112 = pnand %p110, %p111
    %p113 = pneg %p112
    // Predicated region
    $region9: #{group_linear_pallas.1} parent=5 // pred_check
      _
    $region10: #{group_linear_pallas.1} parent=5 // pred_check_branch
      %115 = sbr.rel (%p112) target = $region12
    $region11: #{group_linear_pallas.1} parent=5 // pred_region
      %s116 = ssub.s32 %s8, 1
    $region12: #{group_linear_pallas.1} parent=5 // pred_fallthru
      _
    %p117 = scmp.lt.s32.totalorder %s8, 4
    // Predicated region
    $region13: #{group_linear_pallas.1} parent=5 // pred_check
      %p118 = pneg %p117
    $region14: #{group_linear_pallas.1} parent=5 // pred_check_branch
      %120 = sbr.rel (%p118) target = $region16
    $region15: #{group_linear_pallas.1} parent=5 // pred_region
      // Predicated region
      $region17: #{group_linear_pallas.1} parent=15 // pred_check
        %p121 = pneg %p42
      $region18: #{group_linear_pallas.1} parent=15 // pred_check_branch
        %123 = sbr.rel (%p121) target = $region20
      $region19: #{group_linear_pallas.1} parent=15 // pred_region
        %p124 = scmp.lt.s32.totalorder %s16, 0
        %s125 = scalar_select %p124, %s16, 0
        %p126 = scmp.lt.s32.totalorder %s15, 3
        %s127 = scalar_select %p126, %s15, 3
        %s128 = smul.addr %s125, 4
        %s129 = sadd.s32 %s127, %s128
        %s130 = smul.addr %s129, 8
        %s131 = scalar_lea.vmem %s0, %s130
      $region20: #{group_linear_pallas.1} parent=15 // pred_fallthru
        _
      // Predicated region
      $region21: #{group_linear_pallas.1} parent=15 // pred_check
        %p132 = pneg %p68
      $region22: #{group_linear_pallas.1} parent=15 // pred_check_branch
        %134 = sbr.rel (%p132) target = $region24
      $region23: #{group_linear_pallas.1} parent=15 // pred_region
        %s135 = smul.u32 16, %s15
        %p136 = scmp.lt.s32.totalorder %s135, 63
        %s137 = scalar_select %p136, %s135, 63
        %s138 = smul.addr %s137, 8
        %s139 = scalar_lea.vmem %s1, %s138
        %s140 = smul.u32 16, %s15
      $region24: #{group_linear_pallas.1} parent=15 // pred_fallthru
        _
    $region16: #{group_linear_pallas.1} parent=5 // pred_fallthru
      _
    %p141 = scmp.le.s32.totalorder 1, %s8
    %p142 = scmp.lt.s32.totalorder %s8, 5
    %p143 = pnand %p141, %p142
    %p144 = pneg %p143
    // Predicated region
    $region25: #{group_linear_pallas.1} parent=5 // pred_check
      _
    $region26: #{group_linear_pallas.1} parent=5 // pred_check_branch
      %146 = sbr.rel (%p143) target = $region28
    $region27: #{group_linear_pallas.1} parent=5 // pred_region
      %s147 = ssub.s32 %s8, 1
      %p148 = scmp.lt.s32.totalorder %s18, 0
      %s149 = scalar_select %p148, %s18, 0
      %p150 = scmp.lt.s32.totalorder %s17, 3
      %s151 = scalar_select %p150, %s17, 3
      %s152 = smul.addr %s149, 4
      %s153 = sadd.s32 %s151, %s152
      %s154 = smul.addr %s153, 8
      %s155 = scalar_lea.vmem %s0, %s154
      %p156 = pneg %p48
      %p157 = pneg %p45
      %s158 = smul.u32 16, %s17
      %p159 = scmp.lt.s32.totalorder %s158, 63
      %s160 = scalar_select %p159, %s158, 63
      %s161 = smul.addr %s160, 8
      %s162 = scalar_lea.vmem %s1, %s161
      %p163 = pneg %p74
      %p164 = pneg %p71
      %p165 = pneg %p102
      %p166 = pneg %p99
      %p167 = scmp.lt.s32.totalorder %s18, 0
      %s168 = scalar_select %p167, %s18, 0
      %p169 = scmp.lt.s32.totalorder %s17, 3
      %s170 = scalar_select %p169, %s17, 3
      %s171 = smul.addr %s168, 4
      %s172 = sadd.s32 %s170, %s171
      %s173 = smul.addr %s172, 8
      %s174 = scalar_lea.vmem %s2, %s173
      %p175 = scmp.lt.s32.totalorder %s18, 0
      %s176 = scalar_select %p175, %s18, 0
      %p177 = scmp.lt.s32.totalorder %s17, 3
      %s178 = scalar_select %p177, %s17, 3
      %s179 = smul.addr %s176, 4
      %s180 = sadd.s32 %s178, %s179
      %s181 = smul.addr %s180, 8
      %s182 = scalar_lea.vmem %s0, %s181
      %s183 = smul.u32 16, %s17
      %p184 = scmp.lt.s32.totalorder %s183, 63
      %s185 = scalar_select %p184, %s183, 63
      %s186 = smul.addr %s185, 8
      %s187 = scalar_lea.vmem %s1, %s186
      %s188 = smul.u32 16, %s17
      %p189 = scmp.lt.s32.totalorder %s18, 0
      %s190 = scalar_select %p189, %s18, 0
      %p191 = scmp.lt.s32.totalorder %s17, 3
      %s192 = scalar_select %p191, %s17, 3
      %s193 = smul.addr %s190, 4
      %s194 = sadd.s32 %s192, %s193
      %s195 = smul.addr %s194, 8
      %s196 = scalar_lea.vmem %s2, %s195
      %v197 = vld [vmem:[%s182] sm:$0xff]
      %v198 = vld [vmem:[%s187] sm:$0xff]
      %v199 = vld [vmem:[%s187 + $0x8] sm:$0xff]
      %v200 = vld [vmem:[%s187 + $0x10] sm:$0xff]
      %v201 = vld [vmem:[%s187 + $0x18] sm:$0xff]
      %v202 = vld [vmem:[%s187 + $0x20] sm:$0xff]
      %v203 = vld [vmem:[%s187 + $0x28] sm:$0xff]
      %v204 = vld [vmem:[%s187 + $0x30] sm:$0xff]
      %v205 = vld [vmem:[%s187 + $0x38] sm:$0xff]
      %v206 = vld [vmem:[%s187 + $0x40] sm:$0xff]
      %v207 = vld [vmem:[%s187 + $0x48] sm:$0xff]
      %v208 = vld [vmem:[%s187 + $0x50] sm:$0xff]
      %v209 = vld [vmem:[%s187 + $0x58] sm:$0xff]
      %v210 = vld [vmem:[%s187 + $0x60] sm:$0xff]
      %v211 = vld [vmem:[%s187 + $0x68] sm:$0xff]
      %v212 = vld [vmem:[%s187 + $0x70] sm:$0xff]
      %v213 = vld [vmem:[%s187 + $0x78] sm:$0xff]
      %214 = vmatprep.subr.mxu0 0.0
      %215 = vmatpush1.msra.mxu0 %v198
      %216 = vmatprep.subr.mxu0 0.0
      %217 = vmatpush1.msra.mxu0 %v199
      %218 = vmatprep.subr.mxu0 0.0
      %219 = vmatpush1.msra.mxu0 %v200
      %220 = vmatprep.subr.mxu0 0.0
      %221 = vmatpush1.msra.mxu0 %v201
      %222 = vmatprep.subr.mxu0 0.0
      %223 = vmatpush1.msra.mxu0 %v202
      %224 = vmatprep.subr.mxu0 0.0
      %225 = vmatpush1.msra.mxu0 %v203
      %226 = vmatprep.subr.mxu0 0.0
      %227 = vmatpush1.msra.mxu0 %v204
      %228 = vmatprep.subr.mxu0 0.0
      %229 = vmatpush1.msra.mxu0 %v205
      %230 = vmatprep.subr.mxu0 0.0
      %231 = vmatpush1.msra.mxu0 %v206
      %232 = vmatprep.subr.mxu0 0.0
      %233 = vmatpush1.msra.mxu0 %v207
      %234 = vmatprep.subr.mxu0 0.0
      %235 = vmatpush1.msra.mxu0 %v208
      %236 = vmatprep.subr.mxu0 0.0
      %237 = vmatpush1.msra.mxu0 %v209
      %238 = vmatprep.subr.mxu0 0.0
      %239 = vmatpush1.msra.mxu0 %v210
      %240 = vmatprep.subr.mxu0 0.0
      %241 = vmatpush1.msra.mxu0 %v211
      %242 = vmatprep.subr.mxu0 0.0
      %243 = vmatpush1.msra.mxu0 %v212
      %244 = vmatprep.subr.mxu0 0.0
      %245 = vmatpush1.msra.mxu0 %v213
      %246 = vmatprep.subr.mxu0 0.0
      %247 = vmatpush1.msra.mxu0 0.0
      %248 = vmatprep.subr.mxu0 0.0
      %249 = vmatpush1.msra.mxu0 0.0
      %250 = vmatprep.subr.mxu0 0.0
      %251 = vmatpush1.msra.mxu0 0.0
      %252 = vmatprep.subr.mxu0 0.0
      %253 = vmatpush1.msra.mxu0 0.0
      %254 = vmatprep.subr.mxu0 0.0
      %255 = vmatpush1.msra.mxu0 0.0
      %256 = vmatprep.subr.mxu0 0.0
      %257 = vmatpush1.msra.mxu0 0.0
      %258 = vmatprep.subr.mxu0 0.0
      %259 = vmatpush1.msra.mxu0 0.0
      %260 = vmatprep.subr.mxu0 0.0
      %261 = vmatpush1.msra.mxu0 0.0
      %262 = vmatprep.subr.mxu0 0.0
      %263 = vmatpush1.msra.mxu0 0.0
      %264 = vmatprep.subr.mxu0 0.0
      %265 = vmatpush1.msra.mxu0 0.0
      %266 = vmatprep.subr.mxu0 0.0
      %267 = vmatpush1.msra.mxu0 0.0
      %268 = vmatprep.subr.mxu0 0.0
      %269 = vmatpush1.msra.mxu0 0.0
      %270 = vmatprep.subr.mxu0 0.0
      %271 = vmatpush1.msra.mxu0 0.0
      %272 = vmatprep.subr.mxu0 0.0
      %273 = vmatpush1.msra.mxu0 0.0
      %274 = vmatprep.subr.mxu0 0.0
      %275 = vmatpush1.msra.mxu0 0.0
      %276 = vmatprep.subr.mxu0 0.0
      %277 = vmatpush1.msra.mxu0 0.0
      %278 = vmatprep.mubr.f32.mxu0 0.0
      %279 = vmatmul.mubr.f32.gmra.mrb[0].mxu0 %v197
      %v280 = vpop.f32.mrb[0].mxu0
      %v281 = vadd.f32 0.0, %v280
      %v282 = vpop.f32.mrb[0].mxu0
      %283 = vdwg.mxu0
      %284 = vst [vmem:[%s196] sm:$0xff] %v281
      %p285 = scmp.lt.s32.totalorder %s18, 0
      %s286 = scalar_select %p285, %s18, 0
      %p287 = scmp.lt.s32.totalorder %s17, 3
      %s288 = scalar_select %p287, %s17, 3
      %s289 = smul.addr %s286, 4
      %s290 = sadd.s32 %s288, %s289
      %s291 = smul.addr %s290, 8
      %s292 = scalar_lea.vmem %s2, %s291
      // Predicated region
      $region29: #{group_linear_pallas.1} parent=27 // pred_check
        %p293 = pneg %p99
      $region30: #{group_linear_pallas.1} parent=27 // pred_check_branch
        %295 = sbr.rel (%p293) target = $region32
      $region31: #{group_linear_pallas.1} parent=27 // pred_region
        _
      $region32: #{group_linear_pallas.1} parent=27 // pred_fallthru
        _
    $region28: #{group_linear_pallas.1} parent=5 // pred_fallthru
      _
    %p296 = scmp.le.s32.totalorder 2, %s8
    // Predicated region
    $region33: #{group_linear_pallas.1} parent=5 // pred_check
      %p297 = pneg %p296
    $region34: #{group_linear_pallas.1} parent=5 // pred_check_branch
      %299 = sbr.rel (%p297) target = $region36
    $region35: #{group_linear_pallas.1} parent=5 // pred_region
      %s300 = ssub.s32 %s8, 2
      // Predicated region
      $region37: #{group_linear_pallas.1} parent=35 // pred_check
        %p301 = pneg %p105
      $region38: #{group_linear_pallas.1} parent=35 // pred_check_branch
        %303 = sbr.rel (%p301) target = $region40
      $region39: #{group_linear_pallas.1} parent=35 // pred_region
        %p304 = scmp.lt.s32.totalorder %s20, 0
        %s305 = scalar_select %p304, %s20, 0
        %p306 = scmp.lt.s32.totalorder %s19, 3
        %s307 = scalar_select %p306, %s19, 3
        %s308 = smul.addr %s305, 4
        %s309 = sadd.s32 %s307, %s308
        %s310 = smul.addr %s309, 8
        %s311 = scalar_lea.vmem %s2, %s310
      $region40: #{group_linear_pallas.1} parent=35 // pred_fallthru
        _
    $region36: #{group_linear_pallas.1} parent=5 // pred_fallthru
      _
  $region6: #{group_linear_pallas.1} parent=0 // loop_footer
    %s12 = sadd.s32 1, %s8
  $region7: #{group_linear_pallas.1} parent=0 // loop_footer_branch
    %7 = sbr.rel target = $region3
  $region8: #{group_linear_pallas.1} parent=0 // loop_exit
    _

</llo_original>
